<compile_context>
chip_gen: v7x
topology: tpu7x:2x2x1
jax: 0.10.0
libtpu: 0.0.40
codegen_flags: <defaults>
</compile_context>

<pallas_src>
from functools import partial

import jax
import jax.numpy as jnp
from jax.experimental import pallas as pl
from jax.experimental.pallas import tpu as pltpu


# ----------------------------------------------------------------------------
# VMEM budgeting (per-generation: v7x has 64 MiB/TC, v5e/v6e have 128 MiB).
# ----------------------------------------------------------------------------
def _query_vmem_capacity_bytes():
    try:
        return int(pltpu.get_tpu_info().vmem_capacity_bytes)
    except Exception:
        return 64 * 1024 * 1024  # conservative fallback (v7x per-TC VMEM)


_VMEM_CAP = _query_vmem_capacity_bytes()
# Working-set budget for double-buffered block buffers + f32 temporaries.
_WORKSET_BUDGET = (_VMEM_CAP * 5) // 8
# Raised scoped-VMEM limit (default scoped limit is far below physical).
_VMEM_LIMIT = min((_VMEM_CAP * 3) // 4, 96 * 1024 * 1024)


def _round_up(x, m):
    return ((x + m - 1) // m) * m


def _per_elem_vmem_bytes(dtype):
    # 2x double-buffered input + 2x double-buffered output (input dtype)
    # + one block-sized f32 temporary for exp(x).
    itemsize = jnp.dtype(dtype).itemsize
    return 4 * itemsize + 4


def _choose_tile_d(n_rows, d, dtype):
    """Largest lane tile (multiple of 128) whose single-pass working set (full
    reduction axis resident) fits the budget.  None -> use the two-pass path."""
    per_lane_col = n_rows * _per_elem_vmem_bytes(dtype)
    max_lanes = _WORKSET_BUDGET // max(per_lane_col, 1)
    max_lanes = (max_lanes // 128) * 128
    if max_lanes < 128:
        return None
    d128 = _round_up(d, 128)
    tile_d = min(max_lanes, d128)
    # Pipeline depth / megacore: prefer >= 4 grid steps along D (>= 2 per
    # TensorCore on v7x, >= 3 for DMA/compute overlap on v5e/v6e), but never
    # shrink below 512 lanes just to manufacture steps.
    if tile_d > 512 and pl.cdiv(d128, tile_d) < 4:
        tile_d = max(_round_up(pl.cdiv(d128, 4), 128), 512)
    return tile_d


def _choose_two_pass_tiles(n, d, dtype):
    per_elem = _per_elem_vmem_bytes(dtype)
    d128 = _round_up(d, 128)
    tile_d = min(2048, d128)
    tile_n = _WORKSET_BUDGET // (tile_d * per_elem)
    tile_n = (tile_n // 8) * 8
    tile_n = max(8, min(tile_n, 1024))
    return tile_n, tile_d


# ----------------------------------------------------------------------------
# Kernels
# ----------------------------------------------------------------------------
def _softmax_dim0_kernel(x_ref, o_ref):
    # Whole reduction axis (axis 0) resident in the block; each lane column is
    # independent: exp (EUP) + column sum (XLU) + reciprocal * multiply (VPU).
    # Out-of-bounds lanes of a partial last D tile hold garbage but never
    # affect valid columns, and their store is masked by the pipeline.
    e = jnp.exp(x_ref[...].astype(jnp.float32))
    s = jnp.sum(e, axis=0, keepdims=True)          # (1, tile_d)
    o_ref[...] = (e * pl.reciprocal(s, approx=False)).astype(o_ref.dtype)


def _colsum_kernel(x_ref, s_ref, *, n_rows, mask_rows):
    # Two-pass path, pass 1: accumulate column sums of exp(x) in an output
    # block resident across the "arbitrary" N grid axis.  exp(x) is NOT
    # written to HBM (pass 2 recomputes it).
    jn = pl.program_id(1)

    @pl.when(jn == 0)
    def _():
        s_ref[...] = jnp.zeros_like(s_ref)

    e = jnp.exp(x_ref[...].astype(jnp.float32))
    if mask_rows:
        tile_n = x_ref.shape[0]
        row = jn * tile_n + jax.lax.broadcasted_iota(jnp.int32, e.shape, 0)
        e = jnp.where(row < n_rows, e, 0.0)
    s_ref[...] += jnp.sum(e, axis=0, keepdims=True)


def _normalize_recompute_kernel(x_ref, s_ref, o_ref):
    # Two-pass path, pass 2: re-read x, recompute exp (hidden under DMA) and
    # multiply by the reciprocal of the column sums.
    e = jnp.exp(x_ref[...].astype(jnp.float32))
    inv = pl.reciprocal(s_ref[...], approx=False)  # (1, tile_d)
    o_ref[...] = (e * inv).astype(o_ref.dtype)


def _softmax_1d_single_kernel(x_ref, o_ref):
    # 1-D input, single full-array (1, n) block: full lane reduce.
    e = jnp.exp(x_ref[...].astype(jnp.float32))
    s = jnp.sum(e, axis=1, keepdims=True)          # (1, 1)
    o_ref[...] = (e * pl.reciprocal(s, approx=False)).astype(o_ref.dtype)


def _colsum_1d_kernel(x_ref, s_ref, *, n, mask_cols):
    # 1-D two-pass, pass 1: scalar partial-sum accumulator, lane mask on the
    # (possibly partial) last tile.
    i = pl.program_id(0)

    @pl.when(i == 0)
    def _():
        s_ref[...] = jnp.zeros_like(s_ref)

    e = jnp.exp(x_ref[...].astype(jnp.float32))
    if mask_cols:
        tile = x_ref.shape[1]
        col = i * tile + jax.lax.broadcasted_iota(jnp.int32, e.shape, 1)
        e = jnp.where(col < n, e, 0.0)
    s_ref[...] += jnp.sum(e, axis=1, keepdims=True)


def _normalize_1d_kernel(x_ref, s_ref, o_ref):
    e = jnp.exp(x_ref[...].astype(jnp.float32))
    o_ref[...] = (e * pl.reciprocal(s_ref[...], approx=False)).astype(o_ref.dtype)


# ----------------------------------------------------------------------------
# Wrappers
# ----------------------------------------------------------------------------
def _single_pass_softmax_dim0(x2d, tile_d):
    N, D = x2d.shape
    if tile_d >= D:
        tile_d = D                     # one full block along D, no masking
    grid_d = pl.cdiv(D, tile_d)
    return pl.pallas_call(
        _softmax_dim0_kernel,
        out_shape=jax.ShapeDtypeStruct((N, D), x2d.dtype),
        grid_spec=pltpu.PrefetchScalarGridSpec(
            num_scalar_prefetch=0,
            grid=(grid_d,),
            in_specs=[pl.BlockSpec((N, tile_d), lambda j: (0, j))],
            out_specs=pl.BlockSpec((N, tile_d), lambda j: (0, j)),
        ),
        compiler_params=pltpu.CompilerParams(
            dimension_semantics=("parallel",),
            vmem_limit_bytes=_VMEM_LIMIT),
    )(x2d)


def _two_pass_softmax_dim0(x2d, tile_n, tile_d):
    """Reduction axis does not fit one VMEM block.  Pass 1 accumulates column
    sums of exp(x); pass 2 re-reads x and normalizes.  No HBM exp(x)
    intermediate, no wrapper-side padding or slicing."""
    N, D = x2d.shape
    if tile_d >= D:
        tile_d = D
    if tile_n >= N:
        tile_n = N
    n_d = pl.cdiv(D, tile_d)
    n_n = pl.cdiv(N, tile_n)
    mask_rows = (N % tile_n) != 0

    col_sums = pl.pallas_call(
        partial(_colsum_kernel, n_rows=N, mask_rows=mask_rows),
        out_shape=jax.ShapeDtypeStruct((1, D), jnp.float32),
        grid_spec=pltpu.PrefetchScalarGridSpec(
            num_scalar_prefetch=0,
            grid=(n_d, n_n),                       # reduction axis last
            in_specs=[pl.BlockSpec((tile_n, tile_d), lambda jd, jn: (jn, jd))],
            out_specs=pl.BlockSpec((1, tile_d), lambda jd, jn: (0, jd)),
        ),
        compiler_params=pltpu.CompilerParams(
            dimension_semantics=("parallel", "arbitrary"),
            vmem_limit_bytes=_VMEM_LIMIT),
    )(x2d)

    out = pl.pallas_call(
        _normalize_recompute_kernel,
        out_shape=jax.ShapeDtypeStruct((N, D), x2d.dtype),
        grid_spec=pltpu.PrefetchScalarGridSpec(
            num_scalar_prefetch=0,
            grid=(n_n, n_d),
            in_specs=[pl.BlockSpec((tile_n, tile_d), lambda i, j: (i, j)),
                      pl.BlockSpec((1, tile_d), lambda i, j: (0, j))],
            out_specs=pl.BlockSpec((tile_n, tile_d), lambda i, j: (i, j)),
        ),
        compiler_params=pltpu.CompilerParams(
            dimension_semantics=("parallel", "parallel"),
            vmem_limit_bytes=_VMEM_LIMIT),
    )(x2d, col_sums)
    return out


def _two_pass_softmax_1d(x, tile):
    n = x.shape[0]
    x2 = x.reshape(1, n)
    tile = min(tile, _round_up(n, 128))
    if tile >= n:
        tile = n                       # one full block, no masking
    nblk = pl.cdiv(n, tile)
    mask_cols = (n % tile) != 0

    total = pl.pallas_call(
        partial(_colsum_1d_kernel, n=n, mask_cols=mask_cols),
        out_shape=jax.ShapeDtypeStruct((1, 1), jnp.float32),
        grid_spec=pltpu.PrefetchScalarGridSpec(
            num_scalar_prefetch=0,
            grid=(nblk,),
            in_specs=[pl.BlockSpec((1, tile), lambda i: (0, i))],
            out_specs=pl.BlockSpec((1, 1), lambda i: (0, 0)),
        ),
        compiler_params=pltpu.CompilerParams(
            dimension_semantics=("arbitrary",),
            vmem_limit_bytes=_VMEM_LIMIT),
    )(x2)

    out = pl.pallas_call(
        _normalize_1d_kernel,
        out_shape=jax.ShapeDtypeStruct((1, n), x.dtype),
        grid_spec=pltpu.PrefetchScalarGridSpec(
            num_scalar_prefetch=0,
            grid=(nblk,),
            in_specs=[pl.BlockSpec((1, tile), lambda i: (0, i)),
                      pl.BlockSpec((1, 1), lambda i: (0, 0))],
            out_specs=pl.BlockSpec((1, tile), lambda i: (0, i)),
        ),
        compiler_params=pltpu.CompilerParams(
            dimension_semantics=("parallel",),
            vmem_limit_bytes=_VMEM_LIMIT),
    )(x2, total)
    return out.reshape(n)


def _softmax_1d(x):
    n = x.shape[0]
    itemsize = jnp.dtype(x.dtype).itemsize
    # (1, n) blocks are sublane-padded (x8) in VMEM; account for that.
    per_elem = 8 * (4 * itemsize + 4)
    if n * per_elem <= _WORKSET_BUDGET:
        out = pl.pallas_call(
            _softmax_1d_single_kernel,
            out_shape=jax.ShapeDtypeStruct((1, n), x.dtype),
            grid_spec=pltpu.PrefetchScalarGridSpec(
                num_scalar_prefetch=0,
                grid=(1,),
                in_specs=[pl.BlockSpec((1, n), lambda i: (0, 0))],
                out_specs=pl.BlockSpec((1, n), lambda i: (0, 0)),
            ),
            compiler_params=pltpu.CompilerParams(
                dimension_semantics=("arbitrary",),
                vmem_limit_bytes=_VMEM_LIMIT),
        )(x.reshape(1, n))
        return out.reshape(n)
    return _two_pass_softmax_1d(x, tile=32768)


def softmax_module(x):
    """Matches Softmax.forward(x): exp(x) / sum(exp(x), dim=0, keepdim=True)."""
    orig_shape = x.shape
    if x.ndim == 1:
        return _softmax_1d(x)
    x2d = x.reshape(x.shape[0], -1)
    N, D = x2d.shape
    tile_d = _choose_tile_d(N, D, x2d.dtype)
    if tile_d is not None:
        out = _single_pass_softmax_dim0(x2d, tile_d)
    else:
        tile_n, tile_d = _choose_two_pass_tiles(N, D, x2d.dtype)
        out = _two_pass_softmax_dim0(x2d, tile_n, tile_d)
    return out.reshape(orig_shape)


# ----------------------------------------------------------------------------
# Self-test
# ----------------------------------------------------------------------------
def _reference(x):
    e = jnp.exp(x)
    return e / jnp.sum(e, axis=0, keepdims=True)


if __name__ == "__main__":
    key = jax.random.PRNGKey(0)
    k0, k1, k2, k3, k4 = jax.random.split(key, 5)

    # 1) Main 2-D shape implied by the module's usage: (seq=8, hidden=32).
    x = jax.random.normal(k0, (8, 32), dtype=jnp.float32)
    y = jax.block_until_ready(softmax_module(x))
    assert y.shape == x.shape and y.dtype == x.dtype
    assert jnp.allclose(y, _reference(x), atol=1e-6, rtol=1e-5)

    # 2) 1-D input: single-block lane-reduce path.
    xv = jax.random.normal(k1, (200,), dtype=jnp.float32)
    yv = jax.block_until_ready(softmax_module(xv))
    ev = jnp.exp(xv)
    assert jnp.allclose(yv, ev / jnp.sum(ev), atol=1e-6, rtol=1e-5)

    # 3) Forced multi-step single-pass with a partial (non-aligned) last D tile
    #    (no wrapper padding / slicing).
    xc = jax.random.normal(k2, (16, 200), dtype=jnp.float32)
    yc = jax.block_until_ready(_single_pass_softmax_dim0(xc, tile_d=128))
    assert jnp.allclose(yc, _reference(xc), atol=1e-6, rtol=1e-5)

    # 4) Forced two-pass (large-N) path: row masking + partial last D tile,
    #    no exp(x) HBM intermediate.
    xb = jax.random.normal(k3, (256, 300), dtype=jnp.float32)
    yb = jax.block_until_ready(_two_pass_softmax_dim0(xb, tile_n=48, tile_d=128))
    assert jnp.allclose(yb, _reference(xb), atol=1e-6, rtol=1e-5)

    # 5) Forced two-pass 1-D path with a partial last lane tile.
    xw = jax.random.normal(k4, (300,), dtype=jnp.float32)
    yw = jax.block_until_ready(_two_pass_softmax_1d(xw, tile=128))
    ew = jnp.exp(xw)
    assert jnp.allclose(yw, ew / jnp.sum(ew), atol=1e-6, rtol=1e-5)

    print("KERNEL_OK")
</pallas_src>

<mosaic_0001>
module attributes {stable_mosaic.version = 11 : i64} {
  func.func @_softmax_dim0_kernel(%arg0: i32, %arg1: memref<8x32xf32, #tpu.memory_space<vmem>>, %arg2: memref<8x32xf32, #tpu.memory_space<vmem>>) attributes {dimension_semantics = [#tpu.dimension_semantics<parallel>], iteration_bounds = array<i64: 1>, scalar_prefetch = 0 : i64, scratch_operands = 0 : i64, tpu.core_type = #tpu.core_type<tc>, window_params = [{transform_indices = @transform_0, window_bounds = array<i64: 8, 32>}, {transform_indices = @transform_1, window_bounds = array<i64: 8, 32>}]} {
    %c0 = arith.constant 0 : index
    %c0_0 = arith.constant 0 : index
    %0 = vector.load %arg1[%c0, %c0_0] : memref<8x32xf32, #tpu.memory_space<vmem>>, vector<8x32xf32>
    %1 = math.exp %0 : vector<8x32xf32>
    %cst = arith.constant dense<0.000000e+00> : vector<32xf32>
    %2 = vector.multi_reduction <add>, %1, %cst [0] : vector<8x32xf32> to vector<32xf32>
    %3 = vector.shape_cast %2 : vector<32xf32> to vector<1x32xf32>
    %4 = tpu.reciprocal %3 : vector<1x32xf32> -> vector<1x32xf32>
    %5 = vector.broadcast %4 : vector<1x32xf32> to vector<8x32xf32>
    %6 = arith.mulf %1, %5 : vector<8x32xf32>
    %c0_1 = arith.constant 0 : index
    %c0_2 = arith.constant 0 : index
    %7 = vector.load %arg2[%c0_1, %c0_2] : memref<8x32xf32, #tpu.memory_space<vmem>>, vector<8x32xf32>
    tpu.vector_store %arg2[%c0_1, %c0_2], %6 {strides = array<i32>} : memref<8x32xf32, #tpu.memory_space<vmem>>, vector<8x32xf32>,
    return
  }
  func.func @transform_0(%arg0: i32) -> (i32, i32) {
    %c0_i32 = arith.constant 0 : i32
    %c0_i32_0 = arith.constant 0 : i32
    return %c0_i32, %arg0 : i32, i32
  }
  func.func @transform_1(%arg0: i32) -> (i32, i32) {
    %c0_i32 = arith.constant 0 : i32
    %c0_i32_0 = arith.constant 0 : i32
    return %c0_i32, %arg0 : i32, i32
  }
}

</mosaic_0001>

<llo_original>
// kernel: tpu_custom_call.1
$region0: #{tpu_custom_call.1}
  #allocation0 [shape = 'u32[]', space=smem, size = 0x4, offset = 0x4, fixed_abs, tag = 'smem constant byte address 0x4 - core index']
  #allocation1 [shape = 'u32[144,128]{1,0:T(1,128)}', space=vmem, size = 0x12000, scoped, tag = 'internal scratch']
  %s0 = inlined_call_operand.hbm [shape: f32[8,32], index: 0, kind: input, shape index: {}]
  %s1 = inlined_call_operand.hbm [shape: f32[8,32], index: 1, kind: output, shape index: {}]
  %s2 = sld [smem:[#allocation0]]
  $region18: #{tpu_custom_call.1} parent=0
    _
  %s4 = ssub.s32 1, %s2
  %s5 = scalar_select 0, %s4, %s2
  $region1: #{tpu_custom_call.1} parent=0
    #allocation2 [shape = 'u8[4096]{0}', space=vmem, size = 0x1000, scoped, tag = 'input window, operand 0, single buffered']
    #allocation3 [shape = 's32[1]{0}', space=sflag, size = 0x4, scoped, tag = 'scoped memory for tpu_custom_call.1']
    #allocation4 [shape = 's32[1]{0}', space=sflag, size = 0x4, scoped, tag = 'scoped memory for tpu_custom_call.1']
    #allocation5 [shape = 'u8[4096]{0}', space=vmem, size = 0x1000, scoped, tag = 'output window, operand 0, single buffered']
    %6 = vsyncpa [#allocation3], 0
    %7 = vsyncpa [#allocation4], 0
    // Predicated region
    $region2: #{tpu_custom_call.1} parent=1 // pred_check
      _
    $region3: #{tpu_custom_call.1} parent=1 // pred_check_branch
      %9 = sbr.rel (0) target = $region5
    $region4: #{tpu_custom_call.1} parent=1 // pred_region
      %s11 = ssub.s32 128, 128
      %12 = vsyncadd [#allocation3], %s11
      %s14 = sshll.u32 [#allocation2], 4
      %s15 = int_to_ptr.vmem [resolvable:$true] %s14
      %17 = dma.hbm_to_vmem [thread:$0]  %s0, 128, %s15, [#allocation3]
    $region5: #{tpu_custom_call.1} parent=1 // pred_fallthru
      _
    // Predicated region
    $region6: #{tpu_custom_call.1} parent=1 // pred_check
      _
    $region7: #{tpu_custom_call.1} parent=1 // pred_check_branch
      %19 = sbr.rel (0) target = $region9
    $region8: #{tpu_custom_call.1} parent=1 // pred_region
      %20 = dma.done [#allocation3], 128
    $region9: #{tpu_custom_call.1} parent=1 // pred_fallthru
      _
    %v21 = vld [vmem:[#allocation2] sm:$0xff]
    %v22 = vmul.f32 %v21, 1.442695
    %v23 = vpow.pop %v22
    %vm24 = vcmask 261120
    %v25 = vsel %vm24, %v23, 0.0
    %v26 = vrot.slane %v25, 4
    %v27 = vadd.f32 %v25, %v26
    %v28 = vrot.slane %v27, 2
    %v29 = vadd.f32 %v27, %v28
    %v30 = vrot.slane %v29, 1
    %v31 = vadd.f32 %v29, %v30
    %v32 = vrcp.pop %v31
    %v33 = vmul.f32 %v23, %v32
    %34 = vst.msk [vmem:[#allocation5] sm:$0xff] %vm24, %v33
    // Predicated region
    $region10: #{tpu_custom_call.1} parent=1 // pred_check
      _
    $region11: #{tpu_custom_call.1} parent=1 // pred_check_branch
      %36 = sbr.rel (0) target = $region13
    $region12: #{tpu_custom_call.1} parent=1 // pred_region
      %s38 = ssub.s32 128, 128
      %39 = vsyncadd [#allocation4], %s38
      %s41 = sshll.u32 [#allocation5], 4
      %s42 = int_to_ptr.vmem [resolvable:$true] %s41
      %44 = dma.vmem_to_hbm [thread:$0]  %s42, 128, %s1, [#allocation4]
    $region13: #{tpu_custom_call.1} parent=1 // pred_fallthru
      _
    // Predicated region
    $region14: #{tpu_custom_call.1} parent=1 // pred_check
      _
    $region15: #{tpu_custom_call.1} parent=1 // pred_check_branch
      %46 = sbr.rel (0) target = $region17
    $region16: #{tpu_custom_call.1} parent=1 // pred_region
      %47 = dma.done [#allocation4], 128
    $region17: #{tpu_custom_call.1} parent=1 // pred_fallthru
      _
    %48 = vsyncpa [#allocation3], 1
    %49 = vsyncpa [#allocation4], 1

</llo_original>
